<compile_context>
chip_gen: v7x
topology: tpu7x:2x2x1
jax: 0.10.0
libtpu: 0.0.40
codegen_flags: <defaults>
</compile_context>

<pallas_src>
import jax
import jax.numpy as jnp
from jax.experimental import pallas as pl
from jax.experimental.pallas import tpu as pltpu

# TODO(synk): BatchNorm2d is implemented in inference (eval) mode with running
# stats folded into the conv; training-mode batch statistics are not computed.


def _predictor_conv_kernel(x_ref, wc_ref, bc_ref,
                           w1_ref, b1_ref, w2_ref, b2_ref,
                           w3_ref, b3_ref, w4_ref, b4_ref, o_ref):
    """Fused conv(as matmul) + folded BN + ReLU + avg-pool + MLP + sigmoid.

    x_ref  : (TM, W, K)  activation tile, K = 4*num_node, bf16 on the wire
    wc_ref : (K, C)      conv weight with BN scale folded in (bf16)
    bc_ref : (1, C)      conv bias with BN shift folded in (f32)
    w*_ref : (in, out)   classifier weights, pre-transposed (f32, tiny)
    b*_ref : (1, out)    classifier biases (f32); b4 is a (1, 1) SMEM scalar
    o_ref  : (TM, 1)     sigmoid output (f32)
    """
    tm, w, k = x_ref.shape
    c = wc_ref.shape[1]

    # --- Conv2d(4, C, (num_node, 1)) as one (TM*W, K) @ (K, C) MXU matmul ---
    # W (=16) is a multiple of the bf16 sublane tile, so this reshape is a view.
    x = x_ref[...].reshape(tm * w, k)                    # bf16
    z = jnp.dot(x, wc_ref[...], preferred_element_type=jnp.float32)
    z = z + bc_ref[...]                      # folded conv bias + eval BatchNorm
    z = jnp.maximum(z, 0.0)                  # ReLU (f32 epilogue)

    # --- AdaptiveAvgPool2d(1): mean over the width axis (sublane reduce) ---
    pooled = jnp.sum(z.reshape(tm, w, c), axis=1) * jnp.float32(1.0 / w)  # (TM, C)

    # --- classifier MLP: (Linear + Tanh) x 3, pure-f32 tiny dots ---
    h = jnp.tanh(jnp.dot(pooled, w1_ref[...],
                         preferred_element_type=jnp.float32) + b1_ref[...])
    h = jnp.tanh(jnp.dot(h, w2_ref[...],
                         preferred_element_type=jnp.float32) + b2_ref[...])
    h = jnp.tanh(jnp.dot(h, w3_ref[...],
                         preferred_element_type=jnp.float32) + b3_ref[...])

    # --- final Linear(C//8 -> 1): VPU multiply + lane reduce (no N=1 MXU) ---
    logit = jnp.sum(h * w4_ref[...], axis=-1, keepdims=True) + b4_ref[0, 0]
    # Sigmoid with the divide on the EUP slot (approx reciprocal is ~free).
    sig = pl.reciprocal(1.0 + jnp.exp(-logit), approx=True)
    o_ref[...] = sig.astype(o_ref.dtype)


def _replicated(shape):
    """Full-array VMEM block, same block for every grid step (fetched once)."""
    ndim = len(shape)
    return pl.BlockSpec(shape, lambda i: (0,) * ndim)


def predictor_conv_forward(adj, params, *, bn_eps=1e-5, block_rows=1024):
    """adj: (B, 4, num_node, W) -> (B, 1) float32 (eval-mode BatchNorm)."""
    conv_w = params["conv_w"].astype(jnp.float32)      # (C, 4, num_node, 1)
    conv_b = params["conv_b"].astype(jnp.float32)      # (C,)
    gamma = params["bn_gamma"].astype(jnp.float32)
    beta = params["bn_beta"].astype(jnp.float32)
    mean = params["bn_mean"].astype(jnp.float32)
    var = params["bn_var"].astype(jnp.float32)

    B, in_c, num_node, width = adj.shape
    C = conv_w.shape[0]
    K = in_c * num_node

    # Fold eval-mode BatchNorm (per-channel affine) into the tiny conv params.
    # Conv weight goes bf16 to match the bf16 activation on the MXU (no mixed
    # dtype); the bias/shift stays f32 (added post-accumulate).
    scale = gamma * jax.lax.rsqrt(var + bn_eps)                       # (C,)
    wc = (conv_w.reshape(C, K) * scale[:, None]).T.astype(jnp.bfloat16)  # (K, C)
    bc = ((conv_b - mean) * scale + beta).reshape(1, C)               # (1, C) f32

    # Classifier weights pre-transposed to (in, out); kept f32 (negligible
    # bytes, keeps the small dots + epilogue in a single clean f32 path).
    w1 = params["w1"].astype(jnp.float32).T
    b1 = params["b1"].astype(jnp.float32).reshape(1, -1)
    w2 = params["w2"].astype(jnp.float32).T
    b2 = params["b2"].astype(jnp.float32).reshape(1, -1)
    w3 = params["w3"].astype(jnp.float32).T
    b3 = params["b3"].astype(jnp.float32).reshape(1, -1)
    w4 = params["w4"].astype(jnp.float32).reshape(1, -1)              # (1, C//8)
    b4 = params["b4"].astype(jnp.float32).reshape(1, 1)               # SMEM scalar

    # bf16 wire format FIRST, then the lane-dense relayout (B,4,N,W)->(B,W,K):
    # if the relayout materializes it moves half the bytes, and
    # allow_input_fusion below lets XLA fuse the convert+transpose producer
    # directly into the kernel's input operand instead of a separate HBM pass.
    x = adj.astype(jnp.bfloat16).transpose(0, 3, 1, 2).reshape(B, width, K)

    # Row-tile the batch: big tiles amortize the ~0.35us per-step grid cost,
    # no jnp.pad (last block is ragged; Pallas masks the output writeback).
    tm = int(min(block_rows, B))
    if B >= 16 and pl.cdiv(B, tm) < 2:
        # Ensure >=2 grid steps so the 'parallel' axis shards across v7x's 2 TCs.
        tm = ((B + 15) // 16) * 8           # ~B/2 rounded up to a multiple of 8
    grid = (pl.cdiv(B, tm),)

    # Advisory cost model for XLA's scheduler around the custom call.
    mlp_flops = 2 * B * (C * (C // 2) + (C // 2) * (C // 4)
                         + (C // 4) * (C // 8) + (C // 8))
    weight_bytes = (wc.size * 2 + (bc.size + w1.size + b1.size + w2.size +
                                   b2.size + w3.size + b3.size + w4.size +
                                   b4.size) * 4)
    cost = pl.CostEstimate(
        flops=2 * B * width * K * C + mlp_flops,
        transcendentals=B * (C // 2 + C // 4 + C // 8 + 2),
        bytes_accessed=x.size * 2 + B * 4 + int(weight_bytes),
    )

    out = pl.pallas_call(
        _predictor_conv_kernel,
        out_shape=jax.ShapeDtypeStruct((B, 1), jnp.float32),
        grid=grid,
        in_specs=[
            pl.BlockSpec((tm, width, K), lambda i: (i, 0, 0)),   # activation tile
            _replicated(wc.shape), _replicated(bc.shape),
            _replicated(w1.shape), _replicated(b1.shape),
            _replicated(w2.shape), _replicated(b2.shape),
            _replicated(w3.shape), _replicated(b3.shape),
            _replicated(w4.shape),
            pl.BlockSpec(memory_space=pltpu.MemorySpace.SMEM),   # scalar bias
        ],
        out_specs=pl.BlockSpec((tm, 1), lambda i: (i, 0)),
        compiler_params=pltpu.CompilerParams(
            dimension_semantics=("parallel",),
            vmem_limit_bytes=64 * 1024 * 1024,
            allow_input_fusion=[True] + [False] * 10,
        ),
        cost_estimate=cost,
    )(x, wc, bc, w1, b1, w2, b2, w3, b3, w4, b4)
    return out


def init_params(key, num_node=13, channel=32):
    """Deterministic init mimicking PyTorch defaults (kaiming-uniform bounds)."""
    ks = jax.random.split(key, 14)

    def uni(k, shape, fan_in):
        bound = 1.0 / jnp.sqrt(jnp.float32(fan_in))
        return jax.random.uniform(k, shape, jnp.float32, -bound, bound)

    fan_conv = 4 * num_node * 1
    return {
        "conv_w": uni(ks[0], (channel, 4, num_node, 1), fan_conv),
        "conv_b": uni(ks[1], (channel,), fan_conv),
        # Non-trivial BN stats/affine so the eval-mode BN fold is exercised.
        "bn_gamma": 1.0 + 0.1 * jax.random.normal(ks[2], (channel,), jnp.float32),
        "bn_beta": 0.1 * jax.random.normal(ks[3], (channel,), jnp.float32),
        "bn_mean": 0.1 * jax.random.normal(ks[4], (channel,), jnp.float32),
        "bn_var": jnp.abs(1.0 + 0.1 * jax.random.normal(ks[5], (channel,), jnp.float32)),
        "w1": uni(ks[6], (channel // 2, channel), channel),
        "b1": uni(ks[7], (channel // 2,), channel),
        "w2": uni(ks[8], (channel // 4, channel // 2), channel // 2),
        "b2": uni(ks[9], (channel // 4,), channel // 2),
        "w3": uni(ks[10], (channel // 8, channel // 4), channel // 4),
        "b3": uni(ks[11], (channel // 8,), channel // 4),
        "w4": uni(ks[12], (1, channel // 8), channel // 8),
        "b4": uni(ks[13], (1,), channel // 8),
    }


def reference_forward(adj, p, *, bn_eps=1e-5):
    """Plain-JAX reference of the PyTorch forward (eval-mode BatchNorm)."""
    hp = jax.lax.Precision.HIGHEST
    z = jnp.einsum("bcnw,ocn->bow", adj, p["conv_w"][..., 0], precision=hp)
    z = z + p["conv_b"][None, :, None]
    inv = jax.lax.rsqrt(p["bn_var"] + bn_eps)
    z = (z - p["bn_mean"][None, :, None]) * (p["bn_gamma"] * inv)[None, :, None] \
        + p["bn_beta"][None, :, None]
    z = jnp.maximum(z, 0.0)
    pooled = jnp.mean(z, axis=-1)                                    # (B, C)
    h = jnp.tanh(jnp.dot(pooled, p["w1"].T, precision=hp) + p["b1"])
    h = jnp.tanh(jnp.dot(h, p["w2"].T, precision=hp) + p["b2"])
    h = jnp.tanh(jnp.dot(h, p["w3"].T, precision=hp) + p["b3"])
    return jax.nn.sigmoid(jnp.dot(h, p["w4"].T, precision=hp) + p["b4"])


if __name__ == "__main__":
    # Small deterministic shapes: batch=2, in_channels=4, num_node=13, width=16.
    B, num_node, channel, width = 2, 13, 32, 16
    key = jax.random.PRNGKey(0)
    k_adj, k_param = jax.random.split(key)

    adj = jax.random.normal(k_adj, (B, 4, num_node, width), jnp.float32)
    params = init_params(k_param, num_node=num_node, channel=channel)

    out = predictor_conv_forward(adj, params)
    out = jax.block_until_ready(out)

    ref = reference_forward(adj, params)
    assert out.shape == (B, 1)
    # Tolerance covers the bf16 wire format on the conv matmul and the approx
    # EUP reciprocal in the sigmoid vs. the HIGHEST-precision f32 reference.
    assert jnp.allclose(out, ref, atol=2e-3, rtol=2e-3), (out, ref)

    print("KERNEL_OK")
</pallas_src>

<mosaic_0001>
module attributes {stable_mosaic.version = 11 : i64} {
  func.func @_predictor_conv_kernel(%arg0: i32, %arg1: memref<2x16x52xbf16, #tpu.memory_space<vmem>>, %arg2: memref<52x32xbf16, #tpu.memory_space<vmem>>, %arg3: memref<1x32xf32, #tpu.memory_space<vmem>>, %arg4: memref<32x16xf32, #tpu.memory_space<vmem>>, %arg5: memref<1x16xf32, #tpu.memory_space<vmem>>, %arg6: memref<16x8xf32, #tpu.memory_space<vmem>>, %arg7: memref<1x8xf32, #tpu.memory_space<vmem>>, %arg8: memref<8x4xf32, #tpu.memory_space<vmem>>, %arg9: memref<1x4xf32, #tpu.memory_space<vmem>>, %arg10: memref<1x4xf32, #tpu.memory_space<vmem>>, %arg11: memref<1x1xf32, #tpu.memory_space<smem>>, %arg12: memref<2x1xf32, #tpu.memory_space<vmem>>) attributes {dimension_semantics = [#tpu.dimension_semantics<parallel>], iteration_bounds = array<i64: 1>, scalar_prefetch = 0 : i64, scratch_operands = 0 : i64, tpu.core_type = #tpu.core_type<tc>, window_params = [{transform_indices = @transform_0, window_bounds = array<i64: 2, 16, 52>}, {pipeline_mode = #tpu.pipeline_mode<synchronous>, transform_indices = @transform_1, window_bounds = array<i64: 52, 32>}, {pipeline_mode = #tpu.pipeline_mode<synchronous>, transform_indices = @transform_2, window_bounds = array<i64: 1, 32>}, {pipeline_mode = #tpu.pipeline_mode<synchronous>, transform_indices = @transform_3, window_bounds = array<i64: 32, 16>}, {pipeline_mode = #tpu.pipeline_mode<synchronous>, transform_indices = @transform_4, window_bounds = array<i64: 1, 16>}, {pipeline_mode = #tpu.pipeline_mode<synchronous>, transform_indices = @transform_5, window_bounds = array<i64: 16, 8>}, {pipeline_mode = #tpu.pipeline_mode<synchronous>, transform_indices = @transform_6, window_bounds = array<i64: 1, 8>}, {pipeline_mode = #tpu.pipeline_mode<synchronous>, transform_indices = @transform_7, window_bounds = array<i64: 8, 4>}, {pipeline_mode = #tpu.pipeline_mode<synchronous>, transform_indices = @transform_8, window_bounds = array<i64: 1, 4>}, {pipeline_mode = #tpu.pipeline_mode<synchronous>, transform_indices = @transform_9, window_bounds = array<i64: 1, 4>}, {transform_indices = @transform_10, window_bounds = array<i64: 1, 1>}, {transform_indices = @transform_11, window_bounds = array<i64: 2, 1>}]} {
    %c0 = arith.constant 0 : index
    %c0_0 = arith.constant 0 : index
    %c0_1 = arith.constant 0 : index
    %0 = vector.load %arg1[%c0, %c0_0, %c0_1] : memref<2x16x52xbf16, #tpu.memory_space<vmem>>, vector<2x16x52xbf16>
    %1 = vector.shape_cast %0 : vector<2x16x52xbf16> to vector<32x52xbf16>
    %c0_2 = arith.constant 0 : index
    %c0_3 = arith.constant 0 : index
    %2 = vector.load %arg2[%c0_2, %c0_3] : memref<52x32xbf16, #tpu.memory_space<vmem>>, vector<52x32xbf16>
    %cst = arith.constant dense<0.000000e+00> : vector<32x32xf32>
    %3 = tpu.matmul %1, %2, %cst {dimension_numbers = #tpu.dot_dimension_numbers<[1], [0], [0], [1], [0, 0, 1, 1], [], []>} : vector<32x52xbf16>, vector<52x32xbf16>, vector<32x32xf32> -> vector<32x32xf32>
    %c0_4 = arith.constant 0 : index
    %c0_5 = arith.constant 0 : index
    %4 = vector.load %arg3[%c0_4, %c0_5] : memref<1x32xf32, #tpu.memory_space<vmem>>, vector<1x32xf32>
    %5 = vector.broadcast %4 : vector<1x32xf32> to vector<32x32xf32>
    %6 = arith.addf %3, %5 : vector<32x32xf32>
    %cst_6 = arith.constant 0.000000e+00 : f32
    %7 = vector.broadcast %cst_6 : f32 to vector<32x32xf32>
    %8 = arith.maximumf %6, %7 : vector<32x32xf32>
    %9 = vector.shape_cast %8 : vector<32x32xf32> to vector<2x16x32xf32>
    %cst_7 = arith.constant dense<0.000000e+00> : vector<2x32xf32>
    %10 = vector.multi_reduction <add>, %9, %cst_7 [1] : vector<2x16x32xf32> to vector<2x32xf32>
    %cst_8 = arith.constant 6.250000e-02 : f32
    %11 = vector.broadcast %cst_8 : f32 to vector<2x32xf32>
    %12 = arith.mulf %10, %11 : vector<2x32xf32>
    %c0_9 = arith.constant 0 : index
    %c0_10 = arith.constant 0 : index
    %13 = vector.load %arg4[%c0_9, %c0_10] : memref<32x16xf32, #tpu.memory_space<vmem>>, vector<32x16xf32>
    %cst_11 = arith.constant dense<0.000000e+00> : vector<2x16xf32>
    %14 = tpu.matmul %12, %13, %cst_11 {dimension_numbers = #tpu.dot_dimension_numbers<[1], [0], [0], [1], [0, 0, 1, 1], [], []>} : vector<2x32xf32>, vector<32x16xf32>, vector<2x16xf32> -> vector<2x16xf32>
    %c0_12 = arith.constant 0 : index
    %c0_13 = arith.constant 0 : index
    %15 = vector.load %arg5[%c0_12, %c0_13] : memref<1x16xf32, #tpu.memory_space<vmem>>, vector<1x16xf32>
    %16 = vector.broadcast %15 : vector<1x16xf32> to vector<2x16xf32>
    %17 = arith.addf %14, %16 : vector<2x16xf32>
    %18 = math.tanh %17 : vector<2x16xf32>
    %c0_14 = arith.constant 0 : index
    %c0_15 = arith.constant 0 : index
    %19 = vector.load %arg6[%c0_14, %c0_15] : memref<16x8xf32, #tpu.memory_space<vmem>>, vector<16x8xf32>
    %cst_16 = arith.constant dense<0.000000e+00> : vector<2x8xf32>
    %20 = tpu.matmul %18, %19, %cst_16 {dimension_numbers = #tpu.dot_dimension_numbers<[1], [0], [0], [1], [0, 0, 1, 1], [], []>} : vector<2x16xf32>, vector<16x8xf32>, vector<2x8xf32> -> vector<2x8xf32>
    %c0_17 = arith.constant 0 : index
    %c0_18 = arith.constant 0 : index
    %21 = vector.load %arg7[%c0_17, %c0_18] : memref<1x8xf32, #tpu.memory_space<vmem>>, vector<1x8xf32>
    %22 = vector.broadcast %21 : vector<1x8xf32> to vector<2x8xf32>
    %23 = arith.addf %20, %22 : vector<2x8xf32>
    %24 = math.tanh %23 : vector<2x8xf32>
    %c0_19 = arith.constant 0 : index
    %c0_20 = arith.constant 0 : index
    %25 = vector.load %arg8[%c0_19, %c0_20] : memref<8x4xf32, #tpu.memory_space<vmem>>, vector<8x4xf32>
    %cst_21 = arith.constant dense<0.000000e+00> : vector<2x4xf32>
    %26 = tpu.matmul %24, %25, %cst_21 {dimension_numbers = #tpu.dot_dimension_numbers<[1], [0], [0], [1], [0, 0, 1, 1], [], []>} : vector<2x8xf32>, vector<8x4xf32>, vector<2x4xf32> -> vector<2x4xf32>
    %c0_22 = arith.constant 0 : index
    %c0_23 = arith.constant 0 : index
    %27 = vector.load %arg9[%c0_22, %c0_23] : memref<1x4xf32, #tpu.memory_space<vmem>>, vector<1x4xf32>
    %28 = vector.broadcast %27 : vector<1x4xf32> to vector<2x4xf32>
    %29 = arith.addf %26, %28 : vector<2x4xf32>
    %30 = math.tanh %29 : vector<2x4xf32>
    %c0_24 = arith.constant 0 : index
    %c0_25 = arith.constant 0 : index
    %31 = vector.load %arg10[%c0_24, %c0_25] : memref<1x4xf32, #tpu.memory_space<vmem>>, vector<1x4xf32>
    %32 = vector.broadcast %31 : vector<1x4xf32> to vector<2x4xf32>
    %33 = arith.mulf %30, %32 : vector<2x4xf32>
    %cst_26 = arith.constant dense<0.000000e+00> : vector<2xf32>
    %34 = vector.multi_reduction <add>, %33, %cst_26 [1] : vector<2x4xf32> to vector<2xf32>
    %35 = vector.shape_cast %34 : vector<2xf32> to vector<2x1xf32>
    %c0_27 = arith.constant 0 : index
    %c0_28 = arith.constant 0 : index
    %36 = memref.load %arg11[%c0_27, %c0_28] : memref<1x1xf32, #tpu.memory_space<smem>>
    %37 = vector.broadcast %36 : f32 to vector<2x1xf32>
    %38 = arith.addf %35, %37 : vector<2x1xf32>
    %cst_29 = arith.constant 0.000000e+00 : f32
    %39 = vector.broadcast %cst_29 : f32 to vector<2x1xf32>
    %40 = arith.subf %39, %38 : vector<2x1xf32>
    %41 = math.exp %40 : vector<2x1xf32>
    %cst_30 = arith.constant 1.000000e+00 : f32
    %42 = vector.broadcast %cst_30 : f32 to vector<2x1xf32>
    %43 = arith.addf %42, %41 : vector<2x1xf32>
    %44 = tpu.reciprocal %43 {approx = true} : vector<2x1xf32> -> vector<2x1xf32>
    %c0_31 = arith.constant 0 : index
    %c0_32 = arith.constant 0 : index
    %45 = vector.load %arg12[%c0_31, %c0_32] : memref<2x1xf32, #tpu.memory_space<vmem>>, vector<2x1xf32>
    tpu.vector_store %arg12[%c0_31, %c0_32], %44 {strides = array<i32>} : memref<2x1xf32, #tpu.memory_space<vmem>>, vector<2x1xf32>,
    return
  }
  func.func @transform_0(%arg0: i32) -> (i32, i32, i32) {
    %c0_i32 = arith.constant 0 : i32
    %c0_i32_0 = arith.constant 0 : i32
    %c0_i32_1 = arith.constant 0 : i32
    return %arg0, %c0_i32, %c0_i32_0 : i32, i32, i32
  }
  func.func @transform_1(%arg0: i32) -> (i32, i32) {
    %c0_i32 = arith.constant 0 : i32
    %c0_i32_0 = arith.constant 0 : i32
    %c0_i32_1 = arith.constant 0 : i32
    return %c0_i32, %c0_i32_0 : i32, i32
  }
  func.func @transform_2(%arg0: i32) -> (i32, i32) {
    %c0_i32 = arith.constant 0 : i32
    %c0_i32_0 = arith.constant 0 : i32
    %c0_i32_1 = arith.constant 0 : i32
    return %c0_i32, %c0_i32_0 : i32, i32
  }
  func.func @transform_3(%arg0: i32) -> (i32, i32) {
    %c0_i32 = arith.constant 0 : i32
    %c0_i32_0 = arith.constant 0 : i32
    %c0_i32_1 = arith.constant 0 : i32
    return %c0_i32, %c0_i32_0 : i32, i32
  }
  func.func @transform_4(%arg0: i32) -> (i32, i32) {
    %c0_i32 = arith.constant 0 : i32
    %c0_i32_0 = arith.constant 0 : i32
    %c0_i32_1 = arith.constant 0 : i32
    return %c0_i32, %c0_i32_0 : i32, i32
  }
  func.func @transform_5(%arg0: i32) -> (i32, i32) {
    %c0_i32 = arith.constant 0 : i32
    %c0_i32_0 = arith.constant 0 : i32
    %c0_i32_1 = arith.constant 0 : i32
    return %c0_i32, %c0_i32_0 : i32, i32
  }
  func.func @transform_6(%arg0: i32) -> (i32, i32) {
    %c0_i32 = arith.constant 0 : i32
    %c0_i32_0 = arith.constant 0 : i32
    %c0_i32_1 = arith.constant 0 : i32
    return %c0_i32, %c0_i32_0 : i32, i32
  }
  func.func @transform_7(%arg0: i32) -> (i32, i32) {
    %c0_i32 = arith.constant 0 : i32
    %c0_i32_0 = arith.constant 0 : i32
    %c0_i32_1 = arith.constant 0 : i32
    return %c0_i32, %c0_i32_0 : i32, i32
  }
  func.func @transform_8(%arg0: i32) -> (i32, i32) {
    %c0_i32 = arith.constant 0 : i32
    %c0_i32_0 = arith.constant 0 : i32
    %c0_i32_1 = arith.constant 0 : i32
    return %c0_i32, %c0_i32_0 : i32, i32
  }
  func.func @transform_9(%arg0: i32) -> (i32, i32) {
    %c0_i32 = arith.constant 0 : i32
    %c0_i32_0 = arith.constant 0 : i32
    %c0_i32_1 = arith.constant 0 : i32
    return %c0_i32, %c0_i32_0 : i32, i32
  }
  func.func @transform_10(%arg0: i32) -> (i32, i32) {
    %c0_i32 = arith.constant 0 : i32
    %c0_i32_0 = arith.constant 0 : i32
    %c0_i32_1 = arith.constant 0 : i32
    return %c0_i32, %c0_i32_0 : i32, i32
  }
  func.func @transform_11(%arg0: i32) -> (i32, i32) {
    %c0_i32 = arith.constant 0 : i32
    %c0_i32_0 = arith.constant 0 : i32
    return %arg0, %c0_i32 : i32, i32
  }
}

</mosaic_0001>

<llo_original>
// kernel: tpu_custom_call.1
$region0: #{tpu_custom_call.1}
  #allocation0 [shape = 'u32[]', space=smem, size = 0x4, offset = 0x4, fixed_abs, tag = 'smem constant byte address 0x4 - core index']
  #allocation1 [shape = 'u32[144,128]{1,0:T(1,128)}', space=vmem, size = 0x12000, scoped, tag = 'internal scratch']
  #allocation2 [shape = 'f32[1,1]{1,0:T(1,128)S(6)}', space=smem, size = 0x200, scoped, tag = 'scoped memory for tpu_custom_call.1']
  %s0 = inlined_call_operand.hbm [shape: bf16[2,16,52], index: 0, kind: input, shape index: {}]
  %s1 = inlined_call_operand.hbm [shape: bf16[52,32], index: 1, kind: input, shape index: {}]
  %s2 = inlined_call_operand.hbm [shape: f32[1,32], index: 2, kind: input, shape index: {}]
  %s3 = inlined_call_operand.hbm [shape: f32[32,16], index: 3, kind: input, shape index: {}]
  %s4 = inlined_call_operand.hbm [shape: f32[1,16], index: 4, kind: input, shape index: {}]
  %s5 = inlined_call_operand.hbm [shape: f32[16,8], index: 5, kind: input, shape index: {}]
  %s6 = inlined_call_operand.hbm [shape: f32[1,8], index: 6, kind: input, shape index: {}]
  %s7 = inlined_call_operand.hbm [shape: f32[8,4], index: 7, kind: input, shape index: {}]
  %s8 = inlined_call_operand.hbm [shape: f32[1,4], index: 8, kind: input, shape index: {}]
  %s9 = inlined_call_operand.hbm [shape: f32[1,4], index: 9, kind: input, shape index: {}]
  %s10 = inlined_call_operand.<no memory space> [shape: f32[1,1], index: 10, kind: input, shape index: {}]
  %s11 = inlined_call_operand.hbm [shape: f32[2,1], index: 11, kind: output, shape index: {}]
  %s12 = sld [smem:[#allocation0]]
  $region94: #{tpu_custom_call.1} parent=0
    _
  %s14 = ssub.s32 1, %s12
  %s15 = scalar_select 0, %s14, %s12
  %16 = sst [smem:[#allocation2]] %s10
  $region1: #{tpu_custom_call.1} parent=0
    #allocation3 [shape = 'u8[8192]{0}', space=vmem, size = 0x2000, scoped, tag = 'input window, operand 0, single buffered']
    #allocation4 [shape = 's32[1]{0}', space=sflag, size = 0x4, scoped, tag = 'scoped memory for tpu_custom_call.1']
    #allocation5 [shape = 's32[1]{0}', space=sflag, size = 0x4, scoped, tag = 'scoped memory for tpu_custom_call.1']
    #allocation6 [shape = 'u8[14336]{0}', space=vmem, size = 0x3800, scoped, tag = 'input window, operand 1, single buffered']
    #allocation7 [shape = 's32[1]{0}', space=sflag, size = 0x4, scoped, tag = 'scoped memory for tpu_custom_call.1']
    #allocation8 [shape = 'u8[512]{0}', space=vmem, size = 0x400, scoped, tag = 'input window, operand 2, single buffered']
    #allocation9 [shape = 'u8[16384]{0}', space=vmem, size = 0x4000, scoped, tag = 'input window, operand 3, single buffered']
    #allocation10 [shape = 's32[1]{0}', space=sflag, size = 0x4, scoped, tag = 'scoped memory for tpu_custom_call.1']
    #allocation11 [shape = 'u8[512]{0}', space=vmem, size = 0x400, scoped, tag = 'input window, operand 4, single buffered']
    #allocation12 [shape = 'u8[8192]{0}', space=vmem, size = 0x2000, scoped, tag = 'input window, operand 5, single buffered']
    #allocation13 [shape = 's32[1]{0}', space=sflag, size = 0x4, scoped, tag = 'scoped memory for tpu_custom_call.1']
    #allocation14 [shape = 'u8[512]{0}', space=vmem, size = 0x400, scoped, tag = 'input window, operand 6, single buffered']
    #allocation15 [shape = 'u8[4096]{0}', space=vmem, size = 0x1000, scoped, tag = 'input window, operand 7, single buffered']
    #allocation16 [shape = 's32[1]{0}', space=sflag, size = 0x4, scoped, tag = 'scoped memory for tpu_custom_call.1']
    #allocation17 [shape = 'u8[512]{0}', space=vmem, size = 0x400, scoped, tag = 'input window, operand 8, single buffered']
    #allocation18 [shape = 'u8[512]{0}', space=vmem, size = 0x400, scoped, tag = 'input window, operand 9, single buffered']
    #allocation19 [shape = 's32[1]{0}', space=sflag, size = 0x4, scoped, tag = 'scoped memory for tpu_custom_call.1']
    #allocation20 [shape = 'u8[1024]{0}', space=vmem, size = 0x400, scoped, tag = 'output window, operand 0, single buffered']
    %17 = vsyncpa [#allocation4], 0
    %18 = vsyncpa [#allocation7], 0
    %19 = vsyncpa [#allocation10], 0
    %20 = vsyncpa [#allocation13], 0
    %21 = vsyncpa [#allocation16], 0
    %22 = vsyncpa [#allocation19], 0
    %23 = vsyncpa [#allocation5], 0
    // Predicated region
    $region2: #{tpu_custom_call.1} parent=1 // pred_check
      _
    $region3: #{tpu_custom_call.1} parent=1 // pred_check_branch
      %25 = sbr.rel (0) target = $region5
    $region4: #{tpu_custom_call.1} parent=1 // pred_region
      %s27 = ssub.s32 256, 256
      %28 = vsyncadd [#allocation4], %s27
      %s29 = sshll.u32 [#allocation3], 4
      %s30 = int_to_ptr.vmem [resolvable:$true] %s29
      %35 = dma.hbm_to_vmem [thread:$0]  %s0, 256, %s30, [#allocation4], 64, 64, 4
    $region5: #{tpu_custom_call.1} parent=1 // pred_fallthru
      _
    // Predicated region
    $region6: #{tpu_custom_call.1} parent=1 // pred_check
      _
    $region7: #{tpu_custom_call.1} parent=1 // pred_check_branch
      %37 = sbr.rel (0) target = $region9
    $region8: #{tpu_custom_call.1} parent=1 // pred_region
      %s39 = ssub.s32 448, 448
      %40 = vsyncadd [#allocation7], %s39
      %s41 = sshll.u32 [#allocation6], 4
      %s42 = int_to_ptr.vmem [resolvable:$true] %s41
      %47 = dma.hbm_to_vmem [thread:$0]  %s1, 448, %s42, [#allocation7], 64, 64, 4
    $region9: #{tpu_custom_call.1} parent=1 // pred_fallthru
      _
    // Predicated region
    $region10: #{tpu_custom_call.1} parent=1 // pred_check
      _
    $region11: #{tpu_custom_call.1} parent=1 // pred_check_branch
      %49 = sbr.rel (0) target = $region13
    $region12: #{tpu_custom_call.1} parent=1 // pred_region
      %s51 = ssub.s32 16, 16
      %52 = vsyncadd [#allocation7], %s51
      %s54 = sshll.u32 [#allocation8], 4
      %s55 = int_to_ptr.vmem [resolvable:$true] %s54
      %57 = dma.hbm_to_vmem [thread:$0]  %s2, 16, %s55, [#allocation7]
    $region13: #{tpu_custom_call.1} parent=1 // pred_fallthru
      _
    // Predicated region
    $region14: #{tpu_custom_call.1} parent=1 // pred_check
      _
    $region15: #{tpu_custom_call.1} parent=1 // pred_check_branch
      %59 = sbr.rel (0) target = $region17
    $region16: #{tpu_custom_call.1} parent=1 // pred_region
      %s61 = ssub.s32 512, 512
      %62 = vsyncadd [#allocation10], %s61
      %s63 = sshll.u32 [#allocation9], 4
      %s64 = int_to_ptr.vmem [resolvable:$true] %s63
      %69 = dma.hbm_to_vmem [thread:$0]  %s3, 512, %s64, [#allocation10], 128, 128, 8
    $region17: #{tpu_custom_call.1} parent=1 // pred_fallthru
      _
    // Predicated region
    $region18: #{tpu_custom_call.1} parent=1 // pred_check
      _
    $region19: #{tpu_custom_call.1} parent=1 // pred_check_branch
      %71 = sbr.rel (0) target = $region21
    $region20: #{tpu_custom_call.1} parent=1 // pred_region
      %s73 = ssub.s32 16, 16
      %74 = vsyncadd [#allocation10], %s73
      %s76 = sshll.u32 [#allocation11], 4
      %s77 = int_to_ptr.vmem [resolvable:$true] %s76
      %79 = dma.hbm_to_vmem [thread:$0]  %s4, 16, %s77, [#allocation10]
    $region21: #{tpu_custom_call.1} parent=1 // pred_fallthru
      _
    // Predicated region
    $region22: #{tpu_custom_call.1} parent=1 // pred_check
      _
    $region23: #{tpu_custom_call.1} parent=1 // pred_check_branch
      %81 = sbr.rel (0) target = $region25
    $region24: #{tpu_custom_call.1} parent=1 // pred_region
      %s83 = ssub.s32 256, 256
      %84 = vsyncadd [#allocation13], %s83
      %s85 = sshll.u32 [#allocation12], 4
      %s86 = int_to_ptr.vmem [resolvable:$true] %s85
      %91 = dma.hbm_to_vmem [thread:$0]  %s5, 256, %s86, [#allocation13], 128, 128, 8
    $region25: #{tpu_custom_call.1} parent=1 // pred_fallthru
      _
    // Predicated region
    $region26: #{tpu_custom_call.1} parent=1 // pred_check
      _
    $region27: #{tpu_custom_call.1} parent=1 // pred_check_branch
      %93 = sbr.rel (0) target = $region29
    $region28: #{tpu_custom_call.1} parent=1 // pred_region
      %s95 = ssub.s32 16, 16
      %96 = vsyncadd [#allocation13], %s95
      %s98 = sshll.u32 [#allocation14], 4
      %s99 = int_to_ptr.vmem [resolvable:$true] %s98
      %101 = dma.hbm_to_vmem [thread:$0]  %s6, 16, %s99, [#allocation13]
    $region29: #{tpu_custom_call.1} parent=1 // pred_fallthru
      _
    // Predicated region
    $region30: #{tpu_custom_call.1} parent=1 // pred_check
      _
    $region31: #{tpu_custom_call.1} parent=1 // pred_check_branch
      %103 = sbr.rel (0) target = $region33
    $region32: #{tpu_custom_call.1} parent=1 // pred_region
      %s105 = ssub.s32 128, 128
      %106 = vsyncadd [#allocation16], %s105
      %s108 = sshll.u32 [#allocation15], 4
      %s109 = int_to_ptr.vmem [resolvable:$true] %s108
      %111 = dma.hbm_to_vmem [thread:$0]  %s7, 128, %s109, [#allocation16]
    $region33: #{tpu_custom_call.1} parent=1 // pred_fallthru
      _
    // Predicated region
    $region34: #{tpu_custom_call.1} parent=1 // pred_check
      _
    $region35: #{tpu_custom_call.1} parent=1 // pred_check_branch
      %113 = sbr.rel (0) target = $region37
    $region36: #{tpu_custom_call.1} parent=1 // pred_region
      %s115 = ssub.s32 16, 16
      %116 = vsyncadd [#allocation16], %s115
      %s118 = sshll.u32 [#allocation17], 4
      %s119 = int_to_ptr.vmem [resolvable:$true] %s118
      %121 = dma.hbm_to_vmem [thread:$0]  %s8, 16, %s119, [#allocation16]
    $region37: #{tpu_custom_call.1} parent=1 // pred_fallthru
      _
    // Predicated region
    $region38: #{tpu_custom_call.1} parent=1 // pred_check
      _
    $region39: #{tpu_custom_call.1} parent=1 // pred_check_branch
      %123 = sbr.rel (0) target = $region41
    $region40: #{tpu_custom_call.1} parent=1 // pred_region
      %s125 = ssub.s32 16, 16
      %126 = vsyncadd [#allocation19], %s125
      %s128 = sshll.u32 [#allocation18], 4
      %s129 = int_to_ptr.vmem [resolvable:$true] %s128
      %131 = dma.hbm_to_vmem [thread:$0]  %s9, 16, %s129, [#allocation19]
    $region41: #{tpu_custom_call.1} parent=1 // pred_fallthru
      _
    // Predicated region
    $region42: #{tpu_custom_call.1} parent=1 // pred_check
      _
    $region43: #{tpu_custom_call.1} parent=1 // pred_check_branch
      %133 = sbr.rel (0) target = $region45
    $region44: #{tpu_custom_call.1} parent=1 // pred_region
      _
    $region45: #{tpu_custom_call.1} parent=1 // pred_fallthru
      _
    // Predicated region
    $region46: #{tpu_custom_call.1} parent=1 // pred_check
      _
    $region47: #{tpu_custom_call.1} parent=1 // pred_check_branch
      %135 = sbr.rel (0) target = $region49
    $region48: #{tpu_custom_call.1} parent=1 // pred_region
      %136 = dma.done [#allocation4], 256
    $region49: #{tpu_custom_call.1} parent=1 // pred_fallthru
      _
    // Predicated region
    $region50: #{tpu_custom_call.1} parent=1 // pred_check
      _
    $region51: #{tpu_custom_call.1} parent=1 // pred_check_branch
      %138 = sbr.rel (0) target = $region53
    $region52: #{tpu_custom_call.1} parent=1 // pred_region
      %139 = dma.done [#allocation7], 448
    $region53: #{tpu_custom_call.1} parent=1 // pred_fallthru
      _
    // Predicated region
    $region54: #{tpu_custom_call.1} parent=1 // pred_check
      _
    $region55: #{tpu_custom_call.1} parent=1 // pred_check_branch
      %141 = sbr.rel (0) target = $region57
    $region56: #{tpu_custom_call.1} parent=1 // pred_region
      %142 = dma.done [#allocation7], 16
    $region57: #{tpu_custom_call.1} parent=1 // pred_fallthru
      _
    // Predicated region
    $region58: #{tpu_custom_call.1} parent=1 // pred_check
      _
    $region59: #{tpu_custom_call.1} parent=1 // pred_check_branch
      %144 = sbr.rel (0) target = $region61
    $region60: #{tpu_custom_call.1} parent=1 // pred_region
      %145 = dma.done [#allocation10], 512
    $region61: #{tpu_custom_call.1} parent=1 // pred_fallthru
      _
    // Predicated region
    $region62: #{tpu_custom_call.1} parent=1 // pred_check
      _
    $region63: #{tpu_custom_call.1} parent=1 // pred_check_branch
      %147 = sbr.rel (0) target = $region65
    $region64: #{tpu_custom_call.1} parent=1 // pred_region
      %148 = dma.done [#allocation10], 16
    $region65: #{tpu_custom_call.1} parent=1 // pred_fallthru
      _
    // Predicated region
    $region66: #{tpu_custom_call.1} parent=1 // pred_check
      _
    $region67: #{tpu_custom_call.1} parent=1 // pred_check_branch
      %150 = sbr.rel (0) target = $region69
    $region68: #{tpu_custom_call.1} parent=1 // pred_region
      %151 = dma.done [#allocation13], 256
    $region69: #{tpu_custom_call.1} parent=1 // pred_fallthru
      _
    // Predicated region
    $region70: #{tpu_custom_call.1} parent=1 // pred_check
      _
    $region71: #{tpu_custom_call.1} parent=1 // pred_check_branch
      %153 = sbr.rel (0) target = $region73
    $region72: #{tpu_custom_call.1} parent=1 // pred_region
      %154 = dma.done [#allocation13], 16
    $region73: #{tpu_custom_call.1} parent=1 // pred_fallthru
      _
    // Predicated region
    $region74: #{tpu_custom_call.1} parent=1 // pred_check
      _
    $region75: #{tpu_custom_call.1} parent=1 // pred_check_branch
      %156 = sbr.rel (0) target = $region77
    $region76: #{tpu_custom_call.1} parent=1 // pred_region
      %157 = dma.done [#allocation16], 128
    $region77: #{tpu_custom_call.1} parent=1 // pred_fallthru
      _
    // Predicated region
    $region78: #{tpu_custom_call.1} parent=1 // pred_check
      _
    $region79: #{tpu_custom_call.1} parent=1 // pred_check_branch
      %159 = sbr.rel (0) target = $region81
    $region80: #{tpu_custom_call.1} parent=1 // pred_region
      %160 = dma.done [#allocation16], 16
    $region81: #{tpu_custom_call.1} parent=1 // pred_fallthru
      _
    // Predicated region
    $region82: #{tpu_custom_call.1} parent=1 // pred_check
      _
    $region83: #{tpu_custom_call.1} parent=1 // pred_check_branch
      %162 = sbr.rel (0) target = $region85
    $region84: #{tpu_custom_call.1} parent=1 // pred_region
      %163 = dma.done [#allocation19], 16
    $region85: #{tpu_custom_call.1} parent=1 // pred_fallthru
      _
    %v165 = vld [vmem:[#allocation3] sm:$0xf]
    %v166 = vld [vmem:[#allocation3 + $0x4] sm:$0xf]
    %v167 = vld [vmem:[#allocation3 + $0x8] sm:$0xf]
    %v168 = vld [vmem:[#allocation3 + $0xc] sm:$0xf]
    %v169 = vld [vmem:[#allocation6] sm:$0xf]
    %v170 = vld [vmem:[#allocation6 + $0x4] sm:$0xf]
    %v171 = vld [vmem:[#allocation6 + $0x8] sm:$0xf]
    %v172 = vld [vmem:[#allocation6 + $0xc] sm:$0xf]
    %v173 = vld [vmem:[#allocation6 + $0x10] sm:$0xf]
    %v174 = vld [vmem:[#allocation6 + $0x14] sm:$0xf]
    %v175 = vld [vmem:[#allocation6 + $0x18] sm:$0x3]
    %v176 = vld [vmem:[#allocation8] sm:$0x1]
    %v178 = vlaneseq
    %v179 = vshrl.u32 %v178, 7
    %v180 = vsub.s32 0, %v179
    %v181 = vrot.slane %v176, %v180
    %v187 = vunpack.c.l.b16 %v165
    %v188 = vunpack.c.l.b16 %v166
    %v189 = vunpack.c.l.b16 %v167
    %v190 = vunpack.c.l.b16 %v168
    %v191 = vpack.c.b16 %v188, %v187
    %v192 = vpack.c.b16 %v190, %v189
    %v200 = vunpack.c.l.b16 %v169
    %v201 = vunpack.c.l.b16 %v170
    %v202 = vunpack.c.l.b16 %v171
    %v203 = vunpack.c.l.b16 %v172
    %v204 = vunpack.c.l.b16 %v173
    %v205 = vunpack.c.l.b16 %v174
    %v206 = vunpack.c.l.b16 %v175
    %v207 = vpack.c.b16 %v201, %v200
    %v208 = vpack.c.b16 %v203, %v202
    %v209 = vpack.c.b16 %v205, %v204
    %v210 = vpack.c.b16 %v206, %v206
    %vm214 = vcmask 424960
    %v216 = vsel %vm214, %v191, 0
    %v219 = vsel %vm214, %v192, 0
    %vm221 = vcmask 1041408
    %v223 = vsel %vm221, %v210, 0
    %225 = vmatprep.subr.bf16.mxu0 0
    %226 = vmatpush1.bf16.msra.mxu0 %v207
    %227 = vmatprep.subr.bf16.mxu0 0
    %228 = vmatpush1.bf16.msra.mxu0 %v208
    %229 = vmatprep.subr.bf16.mxu0 0
    %230 = vmatpush1.bf16.msra.mxu0 %v209
    %231 = vmatprep.subr.bf16.mxu0 0
    %232 = vmatpush1.bf16.msra.mxu0 %v223
    %233 = vmatprep.subr.bf16.mxu0 0
    %234 = vmatpush1.bf16.msra.mxu0 0
    %235 = vmatprep.subr.bf16.mxu0 0
    %236 = vmatpush1.bf16.msra.mxu0 0
    %237 = vmatprep.subr.bf16.mxu0 0
    %238 = vmatpush1.bf16.msra.mxu0 0
    %239 = vmatprep.subr.bf16.mxu0 0
    %240 = vmatpush1.bf16.msra.mxu0 0
    %241 = vmatprep.subr.bf16.mxu0 0
    %242 = vmatpush1.bf16.msra.mxu0 0
    %243 = vmatprep.subr.bf16.mxu0 0
    %244 = vmatpush1.bf16.msra.mxu0 0
    %245 = vmatprep.subr.bf16.mxu0 0
    %246 = vmatpush1.bf16.msra.mxu0 0
    %247 = vmatprep.subr.bf16.mxu0 0
    %248 = vmatpush1.bf16.msra.mxu0 0
    %249 = vmatprep.subr.bf16.mxu0 0
    %250 = vmatpush1.bf16.msra.mxu0 0
    %251 = vmatprep.subr.bf16.mxu0 0
    %252 = vmatpush1.bf16.msra.mxu0 0
    %253 = vmatprep.subr.bf16.mxu0 0
    %254 = vmatpush1.bf16.msra.mxu0 0
    %255 = vmatprep.subr.bf16.mxu0 0
    %256 = vmatpush1.bf16.msra.mxu0 0
    %257 = vmatprep.mubr.bf16.mxu0 0
    %258 = vmatmul.mubr.bf16.gmra.mrb[0].mxu0 %v216
    %v259 = vpop.f32.mrb[0].mxu0
    %v260 = vadd.f32 %v181, %v259
    %v261 = vpop.f32.mrb[0].mxu0
    %v262 = vpop.f32.mrb[0].mxu0
    %v263 = vadd.f32 %v181, %v262
    %v264 = vpop.f32.mrb[0].mxu0
    %265 = vmatprep.mubr.bf16.mxu0 0
    %266 = vmatmul.mubr.bf16.gmra.mrb[0].mxu0 %v219
    %v267 = vpop.f32.mrb[0].mxu0
    %v268 = vadd.f32 %v181, %v267
    %v269 = vpop.f32.mrb[0].mxu0
    %v270 = vpop.f32.mrb[0].mxu0
    %v271 = vadd.f32 %v181, %v270
    %v272 = vpop.f32.mrb[0].mxu0
    %273 = vdwg.mxu0
    %v274 = vmax.f32 %v260, 0.0
    %v275 = vmax.f32 %v263, 0.0
    %v276 = vmax.f32 %v268, 0.0
    %v277 = vmax.f32 %v271, 0.0
    %vm278 = vcmask 261120
    %v279 = vsel %vm278, %v274, 0.0
    %v280 = vsel %vm278, %v275, 0.0
    %v281 = vadd.f32 %v279, %v280
    %v282 = vrot.slane %v281, 4
    %v283 = vadd.f32 %v281, %v282
    %v284 = vrot.slane %v283, 2
    %v285 = vadd.f32 %v283, %v284
    %v286 = vrot.slane %v285, 1
    %v287 = vadd.f32 %v285, %v286
    %v288 = vsel %vm278, %v276, 0.0
    %v289 = vsel %vm278, %v277, 0.0
    %v290 = vadd.f32 %v288, %v289
    %v291 = vrot.slane %v290, 4
    %v292 = vadd.f32 %v290, %v291
    %v293 = vrot.slane %v292, 2
    %v294 = vadd.f32 %v292, %v293
    %v295 = vrot.slane %v294, 1
    %v296 = vadd.f32 %v294, %v295
    %v297 = vmul.f32 %v287, 0.0625
    %v298 = vmul.f32 %v296, 0.0625
    %v299 = vld [vmem:[#allocation9] sm:$0xff]
    %v300 = vld [vmem:[#allocation9 + $0x8] sm:$0xff]
    %v301 = vld [vmem:[#allocation9 + $0x10] sm:$0xff]
    %v302 = vld [vmem:[#allocation9 + $0x18] sm:$0xff]
    %v303 = vld [vmem:[#allocation11] sm:$0x1]
    %v305 = vlaneseq
    %v306 = vshrl.u32 %v305, 7
    %v307 = vsub.s32 0, %v306
    %v308 = vrot.slane %v303, %v307
    %vm312 = vcmask 1041409
    %v313 = vsel %vm312, %v298, %v297
    %v314 = vsel %vm278, %v313, 0
    %316 = vmatprep.subr.mxu0 0.0
    %317 = vmatpush1.msra.mxu0 %v299
    %318 = vmatprep.subr.mxu0 0.0
    %319 = vmatpush1.msra.mxu0 %v300
    %320 = vmatprep.subr.mxu0 0.0
    %321 = vmatpush1.msra.mxu0 %v301
    %322 = vmatprep.subr.mxu0 0.0
    %323 = vmatpush1.msra.mxu0 %v302
    %324 = vmatprep.subr.mxu0 0.0
    %325 = vmatpush1.msra.mxu0 0.0
    %326 = vmatprep.subr.mxu0 0.0
    %327 = vmatpush1.msra.mxu0 0.0
    %328 = vmatprep.subr.mxu0 0.0
    %329 = vmatpush1.msra.mxu0 0.0
    %330 = vmatprep.subr.mxu0 0.0
    %331 = vmatpush1.msra.mxu0 0.0
    %332 = vmatprep.subr.mxu0 0.0
    %333 = vmatpush1.msra.mxu0 0.0
    %334 = vmatprep.subr.mxu0 0.0
    %335 = vmatpush1.msra.mxu0 0.0
    %336 = vmatprep.subr.mxu0 0.0
    %337 = vmatpush1.msra.mxu0 0.0
    %338 = vmatprep.subr.mxu0 0.0
    %339 = vmatpush1.msra.mxu0 0.0
    %340 = vmatprep.subr.mxu0 0.0
    %341 = vmatpush1.msra.mxu0 0.0
    %342 = vmatprep.subr.mxu0 0.0
    %343 = vmatpush1.msra.mxu0 0.0
    %344 = vmatprep.subr.mxu0 0.0
    %345 = vmatpush1.msra.mxu0 0.0
    %346 = vmatprep.subr.mxu0 0.0
    %347 = vmatpush1.msra.mxu0 0.0
    %348 = vmatprep.subr.mxu0 0.0
    %349 = vmatpush1.msra.mxu0 0.0
    %350 = vmatprep.subr.mxu0 0.0
    %351 = vmatpush1.msra.mxu0 0.0
    %352 = vmatprep.subr.mxu0 0.0
    %353 = vmatpush1.msra.mxu0 0.0
    %354 = vmatprep.subr.mxu0 0.0
    %355 = vmatpush1.msra.mxu0 0.0
    %356 = vmatprep.subr.mxu0 0.0
    %357 = vmatpush1.msra.mxu0 0.0
    %358 = vmatprep.subr.mxu0 0.0
    %359 = vmatpush1.msra.mxu0 0.0
    %360 = vmatprep.subr.mxu0 0.0
    %361 = vmatpush1.msra.mxu0 0.0
    %362 = vmatprep.subr.mxu0 0.0
    %363 = vmatpush1.msra.mxu0 0.0
    %364 = vmatprep.subr.mxu0 0.0
    %365 = vmatpush1.msra.mxu0 0.0
    %366 = vmatprep.subr.mxu0 0.0
    %367 = vmatpush1.msra.mxu0 0.0
    %368 = vmatprep.subr.mxu0 0.0
    %369 = vmatpush1.msra.mxu0 0.0
    %370 = vmatprep.subr.mxu0 0.0
    %371 = vmatpush1.msra.mxu0 0.0
    %372 = vmatprep.subr.mxu0 0.0
    %373 = vmatpush1.msra.mxu0 0.0
    %374 = vmatprep.subr.mxu0 0.0
    %375 = vmatpush1.msra.mxu0 0.0
    %376 = vmatprep.subr.mxu0 0.0
    %377 = vmatpush1.msra.mxu0 0.0
    %378 = vmatprep.subr.mxu0 0.0
    %379 = vmatpush1.msra.mxu0 0.0
    %380 = vmatprep.mubr.f32.mxu0 0.0
    %381 = vmatmul.mubr.f32.gmra.mrb[0].mxu0 %v314
    %v382 = vpop.f32.mrb[0].mxu0
    %v383 = vadd.f32 %v308, %v382
    %v384 = vpop.f32.mrb[0].mxu0
    %385 = vdwg.mxu0
    %v386 = vtanh.pop %v383
    %v387 = vld [vmem:[#allocation12] sm:$0xff]
    %v388 = vld [vmem:[#allocation12 + $0x8] sm:$0xff]
    %v389 = vld [vmem:[#allocation14] sm:$0x1]
    %v391 = vlaneseq
    %v392 = vshrl.u32 %v391, 7
    %v393 = vsub.s32 0, %v392
    %v394 = vrot.slane %v389, %v393
    %vm396 = vcmask 130048
    %v398 = vsel %vm396, %v386, 0
    %400 = vmatprep.subr.mxu0 0.0
    %401 = vmatpush1.msra.mxu0 %v387
    %402 = vmatprep.subr.mxu0 0.0
    %403 = vmatpush1.msra.mxu0 %v388
    %404 = vmatprep.subr.mxu0 0.0
    %405 = vmatpush1.msra.mxu0 0.0
    %406 = vmatprep.subr.mxu0 0.0
    %407 = vmatpush1.msra.mxu0 0.0
    %408 = vmatprep.subr.mxu0 0.0
    %409 = vmatpush1.msra.mxu0 0.0
    %410 = vmatprep.subr.mxu0 0.0
    %411 = vmatpush1.msra.mxu0 0.0
    %412 = vmatprep.subr.mxu0 0.0
    %413 = vmatpush1.msra.mxu0 0.0
    %414 = vmatprep.subr.mxu0 0.0
    %415 = vmatpush1.msra.mxu0 0.0
    %416 = vmatprep.subr.mxu0 0.0
    %417 = vmatpush1.msra.mxu0 0.0
    %418 = vmatprep.subr.mxu0 0.0
    %419 = vmatpush1.msra.mxu0 0.0
    %420 = vmatprep.subr.mxu0 0.0
    %421 = vmatpush1.msra.mxu0 0.0
    %422 = vmatprep.subr.mxu0 0.0
    %423 = vmatpush1.msra.mxu0 0.0
    %424 = vmatprep.subr.mxu0 0.0
    %425 = vmatpush1.msra.mxu0 0.0
    %426 = vmatprep.subr.mxu0 0.0
    %427 = vmatpush1.msra.mxu0 0.0
    %428 = vmatprep.subr.mxu0 0.0
    %429 = vmatpush1.msra.mxu0 0.0
    %430 = vmatprep.subr.mxu0 0.0
    %431 = vmatpush1.msra.mxu0 0.0
    %432 = vmatprep.subr.mxu0 0.0
    %433 = vmatpush1.msra.mxu0 0.0
    %434 = vmatprep.subr.mxu0 0.0
    %435 = vmatpush1.msra.mxu0 0.0
    %436 = vmatprep.subr.mxu0 0.0
    %437 = vmatpush1.msra.mxu0 0.0
    %438 = vmatprep.subr.mxu0 0.0
    %439 = vmatpush1.msra.mxu0 0.0
    %440 = vmatprep.subr.mxu0 0.0
    %441 = vmatpush1.msra.mxu0 0.0
    %442 = vmatprep.subr.mxu0 0.0
    %443 = vmatpush1.msra.mxu0 0.0
    %444 = vmatprep.subr.mxu0 0.0
    %445 = vmatpush1.msra.mxu0 0.0
    %446 = vmatprep.subr.mxu0 0.0
    %447 = vmatpush1.msra.mxu0 0.0
    %448 = vmatprep.subr.mxu0 0.0
    %449 = vmatpush1.msra.mxu0 0.0
    %450 = vmatprep.subr.mxu0 0.0
    %451 = vmatpush1.msra.mxu0 0.0
    %452 = vmatprep.subr.mxu0 0.0
    %453 = vmatpush1.msra.mxu0 0.0
    %454 = vmatprep.subr.mxu0 0.0
    %455 = vmatpush1.msra.mxu0 0.0
    %456 = vmatprep.subr.mxu0 0.0
    %457 = vmatpush1.msra.mxu0 0.0
    %458 = vmatprep.subr.mxu0 0.0
    %459 = vmatpush1.msra.mxu0 0.0
    %460 = vmatprep.subr.mxu0 0.0
    %461 = vmatpush1.msra.mxu0 0.0
    %462 = vmatprep.subr.mxu0 0.0
    %463 = vmatpush1.msra.mxu0 0.0
    %464 = vmatprep.mubr.f32.mxu0 0.0
    %465 = vmatmul.mubr.f32.gmra.mrb[0].mxu0 %v398
    %v466 = vpop.f32.mrb[0].mxu0
    %v467 = vadd.f32 %v394, %v466
    %v468 = vpop.f32.mrb[0].mxu0
    %469 = vdwg.mxu0
    %v470 = vtanh.pop %v467
    %v471 = vld [vmem:[#allocation15] sm:$0xff]
    %v472 = vld [vmem:[#allocation17] sm:$0x1]
    %v474 = vlaneseq
    %v475 = vshrl.u32 %v474, 7
    %v476 = vsub.s32 0, %v475
    %v477 = vrot.slane %v472, %v476
    %vm479 = vcmask 64512
    %v481 = vsel %vm479, %v470, 0
    %483 = vmatprep.subr.mxu0 0.0
    %484 = vmatpush1.msra.mxu0 %v471
    %485 = vmatprep.subr.mxu0 0.0
    %486 = vmatpush1.msra.mxu0 0.0
    %487 = vmatprep.subr.mxu0 0.0
    %488 = vmatpush1.msra.mxu0 0.0
    %489 = vmatprep.subr.mxu0 0.0
    %490 = vmatpush1.msra.mxu0 0.0
    %491 = vmatprep.subr.mxu0 0.0
    %492 = vmatpush1.msra.mxu0 0.0
    %493 = vmatprep.subr.mxu0 0.0
    %494 = vmatpush1.msra.mxu0 0.0
    %495 = vmatprep.subr.mxu0 0.0
    %496 = vmatpush1.msra.mxu0 0.0
    %497 = vmatprep.subr.mxu0 0.0
    %498 = vmatpush1.msra.mxu0 0.0
    %499 = vmatprep.subr.mxu0 0.0
    %500 = vmatpush1.msra.mxu0 0.0
    %501 = vmatprep.subr.mxu0 0.0
    %502 = vmatpush1.msra.mxu0 0.0
    %503 = vmatprep.subr.mxu0 0.0
    %504 = vmatpush1.msra.mxu0 0.0
    %505 = vmatprep.subr.mxu0 0.0
    %506 = vmatpush1.msra.mxu0 0.0
    %507 = vmatprep.subr.mxu0 0.0
    %508 = vmatpush1.msra.mxu0 0.0
    %509 = vmatprep.subr.mxu0 0.0
    %510 = vmatpush1.msra.mxu0 0.0
    %511 = vmatprep.subr.mxu0 0.0
    %512 = vmatpush1.msra.mxu0 0.0
    %513 = vmatprep.subr.mxu0 0.0
    %514 = vmatpush1.msra.mxu0 0.0
    %515 = vmatprep.subr.mxu0 0.0
    %516 = vmatpush1.msra.mxu0 0.0
    %517 = vmatprep.subr.mxu0 0.0
    %518 = vmatpush1.msra.mxu0 0.0
    %519 = vmatprep.subr.mxu0 0.0
    %520 = vmatpush1.msra.mxu0 0.0
    %521 = vmatprep.subr.mxu0 0.0
    %522 = vmatpush1.msra.mxu0 0.0
    %523 = vmatprep.subr.mxu0 0.0
    %524 = vmatpush1.msra.mxu0 0.0
    %525 = vmatprep.subr.mxu0 0.0
    %526 = vmatpush1.msra.mxu0 0.0
    %527 = vmatprep.subr.mxu0 0.0
    %528 = vmatpush1.msra.mxu0 0.0
    %529 = vmatprep.subr.mxu0 0.0
    %530 = vmatpush1.msra.mxu0 0.0
    %531 = vmatprep.subr.mxu0 0.0
    %532 = vmatpush1.msra.mxu0 0.0
    %533 = vmatprep.subr.mxu0 0.0
    %534 = vmatpush1.msra.mxu0 0.0
    %535 = vmatprep.subr.mxu0 0.0
    %536 = vmatpush1.msra.mxu0 0.0
    %537 = vmatprep.subr.mxu0 0.0
    %538 = vmatpush1.msra.mxu0 0.0
    %539 = vmatprep.subr.mxu0 0.0
    %540 = vmatpush1.msra.mxu0 0.0
    %541 = vmatprep.subr.mxu0 0.0
    %542 = vmatpush1.msra.mxu0 0.0
    %543 = vmatprep.subr.mxu0 0.0
    %544 = vmatpush1.msra.mxu0 0.0
    %545 = vmatprep.subr.mxu0 0.0
    %546 = vmatpush1.msra.mxu0 0.0
    %547 = vmatprep.mubr.f32.mxu0 0.0
    %548 = vmatmul.mubr.f32.gmra.mrb[0].mxu0 %v481
    %v549 = vpop.f32.mrb[0].mxu0
    %v550 = vadd.f32 %v477, %v549
    %v551 = vpop.f32.mrb[0].mxu0
    %552 = vdwg.mxu0
    %v553 = vtanh.pop %v550
    %v554 = vld [vmem:[#allocation18] sm:$0x1]
    %v556 = vlaneseq
    %v557 = vshrl.u32 %v556, 7
    %v558 = vsub.s32 0, %v557
    %v559 = vrot.slane %v554, %v558
    %v561 = vmul.f32 %v553, %v559
    %vm562 = vcmask 25600
    %v563 = vsel %vm562, %v561, 0.0
    %564 = vadd.xlane.f32.xlu0 %v563
    %v565 = vpop.xlane.xlu0 %564
    %s566 = sld [smem:[#allocation2]]
    %v567 = vstv %s566
    %v568 = vadd.f32 %v565, %v567
    %v569 = vsub.f32 0.0, %v568
    %v570 = vmul.f32 %v569, 1.442695
    %v571 = vpow.pop %v570
    %v572 = vadd.f32 %v571, 1.0
    %v573 = vrcp.pop %v572
    %vm574 = vcmask 1024
    %575 = vst.msk [vmem:[#allocation20] sm:$0x3] %vm574, %v573
    // Predicated region
    $region86: #{tpu_custom_call.1} parent=1 // pred_check
      _
    $region87: #{tpu_custom_call.1} parent=1 // pred_check_branch
      %577 = sbr.rel (0) target = $region89
    $region88: #{tpu_custom_call.1} parent=1 // pred_region
      %s579 = ssub.s32 32, 32
      %580 = vsyncadd [#allocation5], %s579
      %s582 = sshll.u32 [#allocation20], 4
      %s583 = int_to_ptr.vmem [resolvable:$true] %s582
      %585 = dma.vmem_to_hbm [thread:$0]  %s583, 32, %s11, [#allocation5]
    $region89: #{tpu_custom_call.1} parent=1 // pred_fallthru
      _
    // Predicated region
    $region90: #{tpu_custom_call.1} parent=1 // pred_check
      _
    $region91: #{tpu_custom_call.1} parent=1 // pred_check_branch
      %587 = sbr.rel (0) target = $region93
    $region92: #{tpu_custom_call.1} parent=1 // pred_region
      %588 = dma.done [#allocation5], 32
    $region93: #{tpu_custom_call.1} parent=1 // pred_fallthru
      _
    %589 = vsyncpa [#allocation4], 1
    %590 = vsyncpa [#allocation7], 1
    %591 = vsyncpa [#allocation10], 1
    %592 = vsyncpa [#allocation13], 1
    %593 = vsyncpa [#allocation16], 1
    %594 = vsyncpa [#allocation19], 1
    %595 = vsyncpa [#allocation5], 1

</llo_original>
